<compile_context>
chip_gen: v6e
topology: v6e:2x2x1
jax: 0.10.0
libtpu: 0.0.40
codegen_flags: <defaults>
</compile_context>

<pallas_src>
import math
import functools

import jax
import jax.numpy as jnp
import numpy as np
from jax.experimental import pallas as pl
from jax.experimental.pallas import tpu as pltpu


# --------------------------------------------------------------------------
# Pallas kernel: one grid step == one tile of TB whole batch elements
# (rows = TB * T flattened (batch, time) rows).
# --------------------------------------------------------------------------
def _highway_gcc_kernel(cat_ref, x_ref, w_ref, b_ref, pool_ref,
                        res_ref, mean_ref, *, hidden_size):
    H = hidden_size

    # Single packed projection: (rows, (1+k)H) @ ((1+k)H, 2H) -> (rows, 2H)
    z = (jnp.dot(cat_ref[...], w_ref[...], preferred_element_type=jnp.float32)
         + b_ref[...])

    y = jnp.tanh(z[:, 0:H])                 # tanh(w1(x))
    gate = jax.nn.sigmoid(z[:, H:2 * H])    # sigmoid(w2(x) + sum_i wf_i(f_i))

    x = x_ref[...]
    res = gate * x + (1.0 - gate) * y       # highway combine

    res_ref[...] = res.astype(res_ref.dtype)

    # Per-batch mean over the T rows of each batch element in this tile,
    # done as a tiny MXU matmul with a block-diagonal (1/T) pooling matrix.
    mean_ref[...] = jnp.dot(pool_ref[...], res,
                            preferred_element_type=jnp.float32
                            ).astype(mean_ref.dtype)


# --------------------------------------------------------------------------
# Wrapper: parameter packing + pallas_call.
# --------------------------------------------------------------------------
def highway_gcc_forward(x, feats, params):
    """x: (B, T, H); feats: list of (B, T, H).

    Returns (res (B, T, H), res.mean(axis=1) (B, H)) — matching the PyTorch
    module's forward (eval mode, return_gate_info=False).
    """
    B, T, H = x.shape
    k = len(feats)
    N = B * T

    # Flatten (batch, time) into rows so the MXU sees M = B*T, not tiny tiles.
    x2 = x.reshape(N, H)
    ops = [x2] + [f.reshape(N, H) for f in feats]
    cat = jnp.concatenate(ops, axis=-1)                    # (N, (1+k)H)
    Hc = cat.shape[-1]

    # Packed weight ((1+k)H, 2H):
    #   cols [0:H]   : y pre-activation   (W1 acts on x rows only)
    #   cols [H:2H]  : gate pre-activation (W2 on x rows, Wf_i on feat rows)
    w1t = params["w1_w"].T                                 # (H, H)
    w2t = params["w2_w"].T                                 # (H, H)
    zeros = jnp.zeros((H, H), jnp.float32)
    rows = [jnp.concatenate([w1t, w2t], axis=1)]           # (H, 2H)
    for i in range(k):
        rows.append(jnp.concatenate([zeros, params["wf_w"][i].T], axis=1))
    wpack = jnp.concatenate(rows, axis=0)                  # ((1+k)H, 2H)

    bgate = params["w2_b"]
    for i in range(k):
        bgate = bgate + params["wf_b"][i]
    bpack = jnp.concatenate([params["w1_b"], bgate]).reshape(1, 2 * H)

    # Row tiling: each grid step covers TB whole batch elements (TB*T rows).
    # At small sizes this is a single grid step; for large B it tiles while
    # keeping blocks comfortably inside VMEM (v7x has the smallest VMEM).
    TB = B
    if B * T * Hc * 4 > 4 * 1024 * 1024:
        for tb in range(B - 1, 0, -1):
            if B % tb == 0 and (tb * T) % 8 == 0 and tb * T * Hc * 4 <= 4 * 1024 * 1024:
                TB = tb
                break
    TM = TB * T
    grid = (B // TB,)

    # (TB, TM) block-diagonal mean-pooling matrix: pool[b, b*T + t] = 1/T.
    pool = jnp.kron(jnp.eye(TB, dtype=jnp.float32),
                    jnp.full((1, T), 1.0 / T, jnp.float32))

    kernel = functools.partial(_highway_gcc_kernel, hidden_size=H)

    res2, mean = pl.pallas_call(
        kernel,
        out_shape=(
            jax.ShapeDtypeStruct((N, H), x.dtype),
            jax.ShapeDtypeStruct((B, H), x.dtype),
        ),
        grid_spec=pltpu.PrefetchScalarGridSpec(
            num_scalar_prefetch=0,
            grid=grid,
            in_specs=[
                pl.BlockSpec((TM, Hc), lambda i: (i, 0)),       # [x|feats] rows
                pl.BlockSpec((TM, H), lambda i: (i, 0)),        # x rows
                pl.BlockSpec((Hc, 2 * H), lambda i: (0, 0)),    # packed weights
                pl.BlockSpec((1, 2 * H), lambda i: (0, 0)),     # packed bias
                pl.BlockSpec((TB, TM), lambda i: (0, 0)),       # mean-pool matrix
            ],
            out_specs=[
                pl.BlockSpec((TM, H), lambda i: (i, 0)),        # res rows
                pl.BlockSpec((TB, H), lambda i: (i, 0)),        # per-batch mean
            ],
        ),
        compiler_params=pltpu.CompilerParams(
            dimension_semantics=("parallel",)),   # independent row tiles
    )(cat, x2, wpack, bpack, pool)

    return res2.reshape(B, T, H), mean


# --------------------------------------------------------------------------
# Pure-JAX reference (mirrors the PyTorch forward, eval mode) for verification.
# --------------------------------------------------------------------------
def highway_gcc_reference(x, feats, params):
    y = jnp.tanh(x @ params["w1_w"].T + params["w1_b"])
    pre = x @ params["w2_w"].T + params["w2_b"]
    for i, f in enumerate(feats):
        pre = pre + f @ params["wf_w"][i].T + params["wf_b"][i]
    gate = jax.nn.sigmoid(pre)
    res = gate * x + (1.0 - gate) * y
    return res, res.mean(axis=1)


# --------------------------------------------------------------------------
# Deterministic parameter init (uniform, like nn.Linear's default scale).
# --------------------------------------------------------------------------
def init_params(key, hidden_size, num_feats):
    H = hidden_size
    stdv = 1.0 / math.sqrt(H)
    ks = jax.random.split(key, 4 + 2 * num_feats)
    u = lambda kk, shape: jax.random.uniform(kk, shape, jnp.float32, -stdv, stdv)
    params = {
        "w1_w": u(ks[0], (H, H)),
        "w1_b": u(ks[1], (H,)),
        "w2_w": u(ks[2], (H, H)),
        "w2_b": u(ks[3], (H,)),
        "wf_w": [u(ks[4 + 2 * i], (H, H)) for i in range(num_feats)],
        "wf_b": [u(ks[5 + 2 * i], (H,)) for i in range(num_feats)],
    }
    return params


if __name__ == "__main__":
    # Small shapes consistent with the module's forward: x is (B, T, H) and
    # each auxiliary feature is (B, T, H) (Linear(hidden, hidden) on last dim).
    batch, seq_len, hidden_size = 2, 8, 32
    num_feats = 2

    key = jax.random.PRNGKey(0)
    k_p, k_x, k_a0, k_a1 = jax.random.split(key, 4)
    params = init_params(k_p, hidden_size, num_feats)

    x = jax.random.normal(k_x, (batch, seq_len, hidden_size), jnp.float32)
    feats = [
        jax.random.normal(k_a0, (batch, seq_len, hidden_size), jnp.float32),
        jax.random.normal(k_a1, (batch, seq_len, hidden_size), jnp.float32),
    ]

    res, res_mean = highway_gcc_forward(x, feats, params)
    jax.block_until_ready((res, res_mean))

    res_ref, mean_ref = highway_gcc_reference(x, feats, params)

    np.testing.assert_allclose(np.asarray(res), np.asarray(res_ref),
                               rtol=1e-5, atol=1e-5)
    np.testing.assert_allclose(np.asarray(res_mean), np.asarray(mean_ref),
                               rtol=1e-5, atol=1e-5)

    print("KERNEL_OK")
</pallas_src>

<mosaic_0001>
module attributes {stable_mosaic.version = 11 : i64} {
  func.func @_highway_gcc_kernel(%arg0: i32, %arg1: memref<16x96xf32, #tpu.memory_space<vmem>>, %arg2: memref<16x32xf32, #tpu.memory_space<vmem>>, %arg3: memref<96x64xf32, #tpu.memory_space<vmem>>, %arg4: memref<1x64xf32, #tpu.memory_space<vmem>>, %arg5: memref<2x16xf32, #tpu.memory_space<vmem>>, %arg6: memref<16x32xf32, #tpu.memory_space<vmem>>, %arg7: memref<2x32xf32, #tpu.memory_space<vmem>>) attributes {dimension_semantics = [#tpu.dimension_semantics<parallel>], iteration_bounds = array<i64: 1>, scalar_prefetch = 0 : i64, scratch_operands = 0 : i64, tpu.core_type = #tpu.core_type<tc>, window_params = [{transform_indices = @transform_0, window_bounds = array<i64: 16, 96>}, {transform_indices = @transform_1, window_bounds = array<i64: 16, 32>}, {pipeline_mode = #tpu.pipeline_mode<synchronous>, transform_indices = @transform_2, window_bounds = array<i64: 96, 64>}, {pipeline_mode = #tpu.pipeline_mode<synchronous>, transform_indices = @transform_3, window_bounds = array<i64: 1, 64>}, {pipeline_mode = #tpu.pipeline_mode<synchronous>, transform_indices = @transform_4, window_bounds = array<i64: 2, 16>}, {transform_indices = @transform_5, window_bounds = array<i64: 16, 32>}, {transform_indices = @transform_6, window_bounds = array<i64: 2, 32>}]} {
    %c0 = arith.constant 0 : index
    %c0_0 = arith.constant 0 : index
    %0 = vector.load %arg1[%c0, %c0_0] : memref<16x96xf32, #tpu.memory_space<vmem>>, vector<16x96xf32>
    %c0_1 = arith.constant 0 : index
    %c0_2 = arith.constant 0 : index
    %1 = vector.load %arg3[%c0_1, %c0_2] : memref<96x64xf32, #tpu.memory_space<vmem>>, vector<96x64xf32>
    %cst = arith.constant dense<0.000000e+00> : vector<16x64xf32>
    %2 = tpu.matmul %0, %1, %cst {dimension_numbers = #tpu.dot_dimension_numbers<[1], [0], [0], [1], [0, 0, 1, 1], [], []>} : vector<16x96xf32>, vector<96x64xf32>, vector<16x64xf32> -> vector<16x64xf32>
    %c0_3 = arith.constant 0 : index
    %c0_4 = arith.constant 0 : index
    %3 = vector.load %arg4[%c0_3, %c0_4] : memref<1x64xf32, #tpu.memory_space<vmem>>, vector<1x64xf32>
    %4 = vector.broadcast %3 : vector<1x64xf32> to vector<16x64xf32>
    %5 = arith.addf %2, %4 : vector<16x64xf32>
    %6 = vector.extract_strided_slice %5 {offsets = [0, 0], sizes = [16, 32], strides = [1, 1]} : vector<16x64xf32> to vector<16x32xf32>
    %7 = math.tanh %6 : vector<16x32xf32>
    %8 = vector.extract_strided_slice %5 {offsets = [0, 32], sizes = [16, 32], strides = [1, 1]} : vector<16x64xf32> to vector<16x32xf32>
    %9 = arith.negf %8 : vector<16x32xf32>
    %10 = math.exp %9 : vector<16x32xf32>
    %cst_5 = arith.constant 1.000000e+00 : f32
    %11 = vector.broadcast %cst_5 : f32 to vector<16x32xf32>
    %12 = arith.addf %11, %10 : vector<16x32xf32>
    %13 = arith.divf %11, %12 : vector<16x32xf32>
    %c0_6 = arith.constant 0 : index
    %c0_7 = arith.constant 0 : index
    %14 = vector.load %arg2[%c0_6, %c0_7] : memref<16x32xf32, #tpu.memory_space<vmem>>, vector<16x32xf32>
    %15 = arith.mulf %13, %14 : vector<16x32xf32>
    %cst_8 = arith.constant 1.000000e+00 : f32
    %16 = vector.broadcast %cst_8 : f32 to vector<16x32xf32>
    %17 = arith.subf %16, %13 : vector<16x32xf32>
    %18 = arith.mulf %17, %7 : vector<16x32xf32>
    %19 = arith.addf %15, %18 : vector<16x32xf32>
    %c0_9 = arith.constant 0 : index
    %c0_10 = arith.constant 0 : index
    %20 = vector.load %arg6[%c0_9, %c0_10] : memref<16x32xf32, #tpu.memory_space<vmem>>, vector<16x32xf32>
    tpu.vector_store %arg6[%c0_9, %c0_10], %19 {strides = array<i32>} : memref<16x32xf32, #tpu.memory_space<vmem>>, vector<16x32xf32>,
    %c0_11 = arith.constant 0 : index
    %c0_12 = arith.constant 0 : index
    %21 = vector.load %arg5[%c0_11, %c0_12] : memref<2x16xf32, #tpu.memory_space<vmem>>, vector<2x16xf32>
    %cst_13 = arith.constant dense<0.000000e+00> : vector<2x32xf32>
    %22 = tpu.matmul %21, %19, %cst_13 {dimension_numbers = #tpu.dot_dimension_numbers<[1], [0], [0], [1], [0, 0, 1, 1], [], []>} : vector<2x16xf32>, vector<16x32xf32>, vector<2x32xf32> -> vector<2x32xf32>
    %c0_14 = arith.constant 0 : index
    %c0_15 = arith.constant 0 : index
    %23 = vector.load %arg7[%c0_14, %c0_15] : memref<2x32xf32, #tpu.memory_space<vmem>>, vector<2x32xf32>
    tpu.vector_store %arg7[%c0_14, %c0_15], %22 {strides = array<i32>} : memref<2x32xf32, #tpu.memory_space<vmem>>, vector<2x32xf32>,
    return
  }
  func.func @transform_0(%arg0: i32) -> (i32, i32) {
    %c0_i32 = arith.constant 0 : i32
    %c0_i32_0 = arith.constant 0 : i32
    return %arg0, %c0_i32 : i32, i32
  }
  func.func @transform_1(%arg0: i32) -> (i32, i32) {
    %c0_i32 = arith.constant 0 : i32
    %c0_i32_0 = arith.constant 0 : i32
    return %arg0, %c0_i32 : i32, i32
  }
  func.func @transform_2(%arg0: i32) -> (i32, i32) {
    %c0_i32 = arith.constant 0 : i32
    %c0_i32_0 = arith.constant 0 : i32
    %c0_i32_1 = arith.constant 0 : i32
    return %c0_i32, %c0_i32_0 : i32, i32
  }
  func.func @transform_3(%arg0: i32) -> (i32, i32) {
    %c0_i32 = arith.constant 0 : i32
    %c0_i32_0 = arith.constant 0 : i32
    %c0_i32_1 = arith.constant 0 : i32
    return %c0_i32, %c0_i32_0 : i32, i32
  }
  func.func @transform_4(%arg0: i32) -> (i32, i32) {
    %c0_i32 = arith.constant 0 : i32
    %c0_i32_0 = arith.constant 0 : i32
    %c0_i32_1 = arith.constant 0 : i32
    return %c0_i32, %c0_i32_0 : i32, i32
  }
  func.func @transform_5(%arg0: i32) -> (i32, i32) {
    %c0_i32 = arith.constant 0 : i32
    %c0_i32_0 = arith.constant 0 : i32
    return %arg0, %c0_i32 : i32, i32
  }
  func.func @transform_6(%arg0: i32) -> (i32, i32) {
    %c0_i32 = arith.constant 0 : i32
    %c0_i32_0 = arith.constant 0 : i32
    return %arg0, %c0_i32 : i32, i32
  }
}

</mosaic_0001>

<llo_original>
// kernel: tpu_custom_call.1
$region0: #{tpu_custom_call.1}
  #allocation0 [shape = 'u32[]', space=smem, size = 0x4, offset = 0x4, fixed_abs, tag = 'smem constant byte address 0x4 - core index']
  #allocation1 [shape = 'u32[144,128]{1,0:T(1,128)}', space=vmem, size = 0x12000, scoped, tag = 'internal scratch']
  %s0 = inlined_call_operand.vmem [shape: f32[16,96], index: 0, kind: input, shape index: {}]
  %s1 = inlined_call_operand.vmem [shape: f32[16,32], index: 1, kind: input, shape index: {}]
  %s2 = inlined_call_operand.vmem [shape: f32[96,64], index: 2, kind: input, shape index: {}]
  %s3 = inlined_call_operand.vmem [shape: f32[1,64], index: 3, kind: input, shape index: {}]
  %s4 = inlined_call_operand.vmem [shape: f32[2,16], index: 4, kind: input, shape index: {}]
  %s5 = inlined_call_operand.hbm [shape: f32[16,32], index: 5, kind: output, shape index: {0}]
  %s6 = inlined_call_operand.hbm [shape: f32[2,32], index: 6, kind: output, shape index: {1}]
  %7 = xla_tuple %s5, %s6
  %s8 = sld [smem:[#allocation0]]
  $region38: #{tpu_custom_call.1} parent=0
    _
  %s10 = ssub.s32 1, %s8
  %s11 = scalar_select 0, %s10, %s8
  $region1: #{tpu_custom_call.1} parent=0
    #allocation2 [shape = 'u8[8192]{0}', space=vmem, size = 0x2000, scoped, tag = 'output window, operand 0, single buffered']
    #allocation3 [shape = 's32[1]{0}', space=sflag, size = 0x4, scoped, tag = 'scoped memory for tpu_custom_call.1']
    #allocation4 [shape = 'u8[1024]{0}', space=vmem, size = 0x400, scoped, tag = 'output window, operand 1, single buffered']
    #allocation5 [shape = 's32[1]{0}', space=sflag, size = 0x4, scoped, tag = 'scoped memory for tpu_custom_call.1']
    %12 = vsyncpa [#allocation3], 0
    %13 = vsyncpa [#allocation5], 0
    // Predicated region
    $region2: #{tpu_custom_call.1} parent=1 // pred_check
      _
    $region3: #{tpu_custom_call.1} parent=1 // pred_check_branch
      %15 = sbr.rel (0) target = $region5
    $region4: #{tpu_custom_call.1} parent=1 // pred_region
      _
    $region5: #{tpu_custom_call.1} parent=1 // pred_fallthru
      _
    // Predicated region
    $region6: #{tpu_custom_call.1} parent=1 // pred_check
      _
    $region7: #{tpu_custom_call.1} parent=1 // pred_check_branch
      %17 = sbr.rel (0) target = $region9
    $region8: #{tpu_custom_call.1} parent=1 // pred_region
      _
    $region9: #{tpu_custom_call.1} parent=1 // pred_fallthru
      _
    // Predicated region
    $region10: #{tpu_custom_call.1} parent=1 // pred_check
      _
    $region11: #{tpu_custom_call.1} parent=1 // pred_check_branch
      %19 = sbr.rel (0) target = $region13
    $region12: #{tpu_custom_call.1} parent=1 // pred_region
      _
    $region13: #{tpu_custom_call.1} parent=1 // pred_fallthru
      _
    // Predicated region
    $region14: #{tpu_custom_call.1} parent=1 // pred_check
      _
    $region15: #{tpu_custom_call.1} parent=1 // pred_check_branch
      %21 = sbr.rel (0) target = $region17
    $region16: #{tpu_custom_call.1} parent=1 // pred_region
      _
    $region17: #{tpu_custom_call.1} parent=1 // pred_fallthru
      _
    // Predicated region
    $region18: #{tpu_custom_call.1} parent=1 // pred_check
      _
    $region19: #{tpu_custom_call.1} parent=1 // pred_check_branch
      %23 = sbr.rel (0) target = $region21
    $region20: #{tpu_custom_call.1} parent=1 // pred_region
      _
    $region21: #{tpu_custom_call.1} parent=1 // pred_fallthru
      _
    %v24 = vld [vmem:[%s0] sm:$0xff]
    %v25 = vld [vmem:[%s0 + $0x8] sm:$0xff]
    %v26 = vld [vmem:[%s2] sm:$0xff]
    %v27 = vld [vmem:[%s2 + $0x8] sm:$0xff]
    %v28 = vld [vmem:[%s2 + $0x10] sm:$0xff]
    %v29 = vld [vmem:[%s2 + $0x18] sm:$0xff]
    %v30 = vld [vmem:[%s2 + $0x20] sm:$0xff]
    %v31 = vld [vmem:[%s2 + $0x28] sm:$0xff]
    %v32 = vld [vmem:[%s2 + $0x30] sm:$0xff]
    %v33 = vld [vmem:[%s2 + $0x38] sm:$0xff]
    %v34 = vld [vmem:[%s2 + $0x40] sm:$0xff]
    %v35 = vld [vmem:[%s2 + $0x48] sm:$0xff]
    %v36 = vld [vmem:[%s2 + $0x50] sm:$0xff]
    %v37 = vld [vmem:[%s2 + $0x58] sm:$0xff]
    %v38 = vld [vmem:[%s3] sm:$0x1]
    %v40 = vlaneseq
    %v41 = vshrl.u32 %v40, 7
    %v42 = vsub.s32 0, %v41
    %v43 = vrot.slane %v38, %v42
    %vm45 = vcmask 785408
    %v47 = vsel %vm45, %v24, 0
    %v50 = vsel %vm45, %v25, 0
    %52 = vmatprep.subr.mxu0 0.0
    %53 = vmatpush1.msra.mxu0 0.0
    %54 = vmatprep.subr.mxu0 0.0
    %55 = vmatpush1.msra.mxu0 0.0
    %56 = vmatprep.subr.mxu0 0.0
    %57 = vmatpush1.msra.mxu0 0.0
    %58 = vmatprep.subr.mxu0 0.0
    %59 = vmatpush1.msra.mxu0 0.0
    %60 = vmatprep.subr.mxu0 0.0
    %61 = vmatpush1.msra.mxu0 %v37
    %62 = vmatprep.subr.mxu0 0.0
    %63 = vmatpush1.msra.mxu0 %v36
    %64 = vmatprep.subr.mxu0 0.0
    %65 = vmatpush1.msra.mxu0 %v35
    %66 = vmatprep.subr.mxu0 0.0
    %67 = vmatpush1.msra.mxu0 %v34
    %68 = vmatprep.subr.mxu0 0.0
    %69 = vmatpush1.msra.mxu0 %v33
    %70 = vmatprep.subr.mxu0 0.0
    %71 = vmatpush1.msra.mxu0 %v32
    %72 = vmatprep.subr.mxu0 0.0
    %73 = vmatpush1.msra.mxu0 %v31
    %74 = vmatprep.subr.mxu0 0.0
    %75 = vmatpush1.msra.mxu0 %v30
    %76 = vmatprep.subr.mxu0 0.0
    %77 = vmatpush1.msra.mxu0 %v29
    %78 = vmatprep.subr.mxu0 0.0
    %79 = vmatpush1.msra.mxu0 %v28
    %80 = vmatprep.subr.mxu0 0.0
    %81 = vmatpush1.msra.mxu0 %v27
    %82 = vmatprep.subr.mxu0 0.0
    %83 = vmatpush1.msra.mxu0 %v26
    %84 = vmatprep.subr.mxu0 0.0
    %85 = vmatpush2.msra.mxu0 0.0
    %86 = vmatprep.subr.mxu0 0.0
    %87 = vmatpush2.msra.mxu0 0.0
    %88 = vmatprep.subr.mxu0 0.0
    %89 = vmatpush2.msra.mxu0 0.0
    %90 = vmatprep.subr.mxu0 0.0
    %91 = vmatpush2.msra.mxu0 0.0
    %92 = vmatprep.subr.mxu0 0.0
    %93 = vmatpush2.msra.mxu0 0.0
    %94 = vmatprep.subr.mxu0 0.0
    %95 = vmatpush2.msra.mxu0 0.0
    %96 = vmatprep.subr.mxu0 0.0
    %97 = vmatpush2.msra.mxu0 0.0
    %98 = vmatprep.subr.mxu0 0.0
    %99 = vmatpush2.msra.mxu0 0.0
    %100 = vmatprep.subr.mxu0 0.0
    %101 = vmatpush2.msra.mxu0 0.0
    %102 = vmatprep.subr.mxu0 0.0
    %103 = vmatpush2.msra.mxu0 0.0
    %104 = vmatprep.subr.mxu0 0.0
    %105 = vmatpush2.msra.mxu0 0.0
    %106 = vmatprep.subr.mxu0 0.0
    %107 = vmatpush2.msra.mxu0 0.0
    %108 = vmatprep.subr.mxu0 0.0
    %109 = vmatpush2.msra.mxu0 0.0
    %110 = vmatprep.subr.mxu0 0.0
    %111 = vmatpush2.msra.mxu0 0.0
    %112 = vmatprep.subr.mxu0 0.0
    %113 = vmatpush2.msra.mxu0 0.0
    %114 = vmatprep.subr.mxu0 0.0
    %115 = vmatpush2.msra.mxu0 0.0
    %116 = vmatprep.mubr.f32.mxu0 0.0
    %117 = vmatmul.mubr.f32.gmra.mxu0 %v47
    %v118 = vpop.f32.mrf.mxu0
    %v119 = vadd.f32 %v43, %v118
    %v120 = vpop.f32.mrf.mxu0
    %121 = vmatprep.mubr.f32.mxu0 0.0
    %122 = vmatmul.mubr.f32.gmra.mxu0 %v50
    %v123 = vpop.f32.mrf.mxu0
    %v124 = vadd.f32 %v43, %v123
    %v125 = vpop.f32.mrf.mxu0
    %126 = vdwg.mxu0
    %v127 = vtanh.pop %v119
    %v128 = vtanh.pop %v124
    %v129 = vxor.u32 %v119, 2147483648
    %v130 = vxor.u32 %v124, 2147483648
    %v131 = vmul.f32 %v129, 1.442695
    %v132 = vpow.pop %v131
    %v133 = vmul.f32 %v130, 1.442695
    %v134 = vpow.pop %v133
    %v135 = vadd.f32 %v132, 1.0
    %v136 = vadd.f32 %v134, 1.0
    %v137 = vrcp.pop %v135
    %v138 = vmul.f32 1.0, %v137
    %v139 = vrcp.pop %v136
    %v140 = vmul.f32 1.0, %v139
    %v141 = vld [vmem:[%s1] sm:$0xff]
    %v142 = vld [vmem:[%s1 + $0x8] sm:$0xff]
    %145 = vrot.lane.b32.xlu0 %v141, 32
    %v146 = vpop.permute.xlu0 %145
    %147 = vrot.lane.b32.xlu0 %v142, 32
    %v148 = vpop.permute.xlu0 %147
    %v151 = vmul.f32 %v138, %v146
    %v152 = vmul.f32 %v140, %v148
    %v153 = vsub.f32 1.0, %v138
    %v154 = vsub.f32 1.0, %v140
    %157 = vrot.lane.b32.xlu0 %v127, 32
    %v158 = vpop.permute.xlu0 %157
    %159 = vrot.lane.b32.xlu0 %v128, 32
    %v160 = vpop.permute.xlu0 %159
    %v163 = vmul.f32 %v153, %v158
    %v164 = vmul.f32 %v154, %v160
    %v165 = vadd.f32 %v151, %v163
    %v166 = vadd.f32 %v152, %v164
    %169 = vrot.lane.b32.xlu0 %v165, 96
    %v170 = vpop.permute.xlu0 %169
    %171 = vrot.lane.b32.xlu0 %v166, 96
    %v172 = vpop.permute.xlu0 %171
    %vm175 = vcmask 261120
    %176 = vst.msk [vmem:[#allocation2] sm:$0xff] %vm175, %v170
    %177 = vst.msk [vmem:[#allocation2 + $0x8] sm:$0xff] %vm175, %v172
    %v178 = vld [vmem:[%s4] sm:$0x3]
    %vm179 = vcmask 130048
    %v181 = vsel %vm179, %v178, 0
    %183 = vmatprep.subr.mxu0 0.0
    %184 = vmatpush1.msra.mxu0 0.0
    %185 = vmatprep.subr.mxu0 0.0
    %186 = vmatpush1.msra.mxu0 0.0
    %187 = vmatprep.subr.mxu0 0.0
    %188 = vmatpush1.msra.mxu0 0.0
    %189 = vmatprep.subr.mxu0 0.0
    %190 = vmatpush1.msra.mxu0 0.0
    %191 = vmatprep.subr.mxu0 0.0
    %192 = vmatpush1.msra.mxu0 0.0
    %193 = vmatprep.subr.mxu0 0.0
    %194 = vmatpush1.msra.mxu0 0.0
    %195 = vmatprep.subr.mxu0 0.0
    %196 = vmatpush1.msra.mxu0 0.0
    %197 = vmatprep.subr.mxu0 0.0
    %198 = vmatpush1.msra.mxu0 0.0
    %199 = vmatprep.subr.mxu0 0.0
    %200 = vmatpush1.msra.mxu0 0.0
    %201 = vmatprep.subr.mxu0 0.0
    %202 = vmatpush1.msra.mxu0 0.0
    %203 = vmatprep.subr.mxu0 0.0
    %204 = vmatpush1.msra.mxu0 0.0
    %205 = vmatprep.subr.mxu0 0.0
    %206 = vmatpush1.msra.mxu0 0.0
    %207 = vmatprep.subr.mxu0 0.0
    %208 = vmatpush1.msra.mxu0 0.0
    %209 = vmatprep.subr.mxu0 0.0
    %210 = vmatpush1.msra.mxu0 0.0
    %211 = vmatprep.subr.mxu0 0.0
    %212 = vmatpush1.msra.mxu0 %v172
    %213 = vmatprep.subr.mxu0 0.0
    %214 = vmatpush1.msra.mxu0 %v170
    %215 = vmatprep.subr.mxu0 0.0
    %216 = vmatpush2.msra.mxu0 0.0
    %217 = vmatprep.subr.mxu0 0.0
    %218 = vmatpush2.msra.mxu0 0.0
    %219 = vmatprep.subr.mxu0 0.0
    %220 = vmatpush2.msra.mxu0 0.0
    %221 = vmatprep.subr.mxu0 0.0
    %222 = vmatpush2.msra.mxu0 0.0
    %223 = vmatprep.subr.mxu0 0.0
    %224 = vmatpush2.msra.mxu0 0.0
    %225 = vmatprep.subr.mxu0 0.0
    %226 = vmatpush2.msra.mxu0 0.0
    %227 = vmatprep.subr.mxu0 0.0
    %228 = vmatpush2.msra.mxu0 0.0
    %229 = vmatprep.subr.mxu0 0.0
    %230 = vmatpush2.msra.mxu0 0.0
    %231 = vmatprep.subr.mxu0 0.0
    %232 = vmatpush2.msra.mxu0 0.0
    %233 = vmatprep.subr.mxu0 0.0
    %234 = vmatpush2.msra.mxu0 0.0
    %235 = vmatprep.subr.mxu0 0.0
    %236 = vmatpush2.msra.mxu0 0.0
    %237 = vmatprep.subr.mxu0 0.0
    %238 = vmatpush2.msra.mxu0 0.0
    %239 = vmatprep.subr.mxu0 0.0
    %240 = vmatpush2.msra.mxu0 0.0
    %241 = vmatprep.subr.mxu0 0.0
    %242 = vmatpush2.msra.mxu0 0.0
    %243 = vmatprep.subr.mxu0 0.0
    %244 = vmatpush2.msra.mxu0 0.0
    %245 = vmatprep.subr.mxu0 0.0
    %246 = vmatpush2.msra.mxu0 0.0
    %247 = vmatprep.mubr.f32.mxu0 0.0
    %248 = vmatmul.mubr.f32.gmra.mxu0 %v181
    %v249 = vpop.f32.mrf.mxu0
    %v250 = vadd.f32 0.0, %v249
    %v251 = vpop.f32.mrf.mxu0
    %252 = vdwg.mxu0
    %vm253 = vcmask 254976
    %254 = vst.msk [vmem:[#allocation4] sm:$0x3] %vm253, %v250
    // Predicated region
    $region22: #{tpu_custom_call.1} parent=1 // pred_check
      _
    $region23: #{tpu_custom_call.1} parent=1 // pred_check_branch
      %256 = sbr.rel (0) target = $region25
    $region24: #{tpu_custom_call.1} parent=1 // pred_region
      %s258 = ssub.s32 256, 256
      %259 = vsyncadd [#allocation3], %s258
      %s260 = sshll.u32 [#allocation2], 4
      %s261 = int_to_ptr.vmem [resolvable:$true] %s260
      %266 = dma.vmem_to_hbm [thread:$0]  %s261, 256, %s5, [#allocation3], 128, 128, 8
    $region25: #{tpu_custom_call.1} parent=1 // pred_fallthru
      _
    // Predicated region
    $region26: #{tpu_custom_call.1} parent=1 // pred_check
      _
    $region27: #{tpu_custom_call.1} parent=1 // pred_check_branch
      %268 = sbr.rel (0) target = $region29
    $region28: #{tpu_custom_call.1} parent=1 // pred_region
      %s270 = ssub.s32 32, 32
      %271 = vsyncadd [#allocation5], %s270
      %s273 = sshll.u32 [#allocation4], 4
      %s274 = int_to_ptr.vmem [resolvable:$true] %s273
      %276 = dma.vmem_to_hbm [thread:$0]  %s274, 32, %s6, [#allocation5]
    $region29: #{tpu_custom_call.1} parent=1 // pred_fallthru
      _
    // Predicated region
    $region30: #{tpu_custom_call.1} parent=1 // pred_check
      _
    $region31: #{tpu_custom_call.1} parent=1 // pred_check_branch
      %278 = sbr.rel (0) target = $region33
    $region32: #{tpu_custom_call.1} parent=1 // pred_region
      %279 = dma.done [#allocation3], 256
    $region33: #{tpu_custom_call.1} parent=1 // pred_fallthru
      _
    // Predicated region
    $region34: #{tpu_custom_call.1} parent=1 // pred_check
      _
    $region35: #{tpu_custom_call.1} parent=1 // pred_check_branch
      %281 = sbr.rel (0) target = $region37
    $region36: #{tpu_custom_call.1} parent=1 // pred_region
      %282 = dma.done [#allocation5], 32
    $region37: #{tpu_custom_call.1} parent=1 // pred_fallthru
      _
    %283 = vsyncpa [#allocation3], 1
    %284 = vsyncpa [#allocation5], 1

</llo_original>
